<compile_context>
chip_gen: v5e
topology: v5e:2x2
jax: 0.10.0
libtpu: 0.0.40
codegen_flags: <defaults>
</compile_context>

<pallas_src>
import functools

import jax
import jax.numpy as jnp
from jax.experimental import pallas as pl
from jax.experimental.pallas import tpu as pltpu


def _l1_loss_kernel(ind_ref, feat_ref, tgt_ref, mask_ref, out_ref,
                    pred_ref, acc_ref, *, inv_total):
    b = pl.program_id(0)
    nb = pl.num_programs(0)
    K, C = pred_ref.shape

    @pl.when(b == 0)
    def _():
        acc_ref[...] = jnp.zeros_like(acc_ref)

    # ---- gather: pred[k, :] = feat[ind[b, k], :] from the VMEM slab ---------
    # feat_ref is the (HW, C) per-batch slab already DMA'd by the pipeline;
    # each read is a scalar-addressed dynamic sublane slice.  K is a static
    # Python int (small), so this unrolls and overlaps the next slab DMA.
    for k in range(K):
        idx = ind_ref[b, k]                              # scalar read from SMEM
        pred_ref[pl.ds(k, 1), :] = feat_ref[pl.ds(idx, 1), :]

    # ---- masked L1 contribution for this batch (single vectorized pass) -----
    pred = pred_ref[...]          # (K, C) f32
    tgt = tgt_ref[...]            # (K, C) f32
    m = mask_ref[...]             # (K, 1) f32, broadcasts over C lanes
    acc_ref[...] += jnp.abs((pred - tgt) * m)            # fused mask multiply

    # ---- finalize: mean over all B*K*C elements ------------------------------
    @pl.when(b == nb - 1)
    def _():
        out_ref[0, 0] = jnp.sum(acc_ref[...]) * inv_total


def l1_loss(output, mask, ind, target):
    """Pallas implementation of L1Loss.forward.

    output: (B, C, H, W) float (NCHW), mask: (B, K), ind: (B, K) int,
    target: (B, K, C) float.
    Returns scalar f32: mean(|pred*mask - target*mask|) over B*K*C elements,
    where pred = _tranpose_and_gather_feat(output, ind).
    """
    B, C, H, W = output.shape
    K = ind.shape[1]
    HW = H * W

    # NHWC-style slab (B, HW, C): one XLA transpose in the wrapper so the
    # in-kernel gather is sublane-addressed.
    feat = jnp.transpose(output.reshape(B, C, HW), (0, 2, 1)).astype(jnp.float32)
    ind_i = jnp.clip(ind.astype(jnp.int32), 0, HW - 1)       # bounds safety
    tgt_f = target.astype(jnp.float32)                        # (B, K, C)
    mask_f = mask.astype(jnp.float32).reshape(B, K, 1)        # (B, K, 1)

    kernel = functools.partial(_l1_loss_kernel, inv_total=1.0 / (B * K * C))

    grid_spec = pltpu.PrefetchScalarGridSpec(
        num_scalar_prefetch=1,                 # ind -> SMEM, passed to index_maps
        grid=(B,),
        in_specs=[
            # per-batch feature slab (HW, C): pipelined, auto double-buffered
            pl.BlockSpec((None, HW, C), lambda b, ind_sref: (b, 0, 0)),
            pl.BlockSpec((None, K, C), lambda b, ind_sref: (b, 0, 0)),   # target
            pl.BlockSpec((None, K, 1), lambda b, ind_sref: (b, 0, 0)),   # mask
        ],
        out_specs=pl.BlockSpec((1, 1), lambda b, ind_sref: (0, 0),
                               memory_space=pltpu.MemorySpace.SMEM),
        scratch_shapes=[
            pltpu.VMEM((K, C), jnp.float32),       # gathered pred
            pltpu.VMEM((K, C), jnp.float32),       # running |diff| accumulator
        ],
    )

    out = pl.pallas_call(
        kernel,
        grid_spec=grid_spec,
        out_shape=jax.ShapeDtypeStruct((1, 1), jnp.float32),
        compiler_params=pltpu.CompilerParams(
            dimension_semantics=("arbitrary",)),    # batch axis is a reduction
    )(ind_i, feat, tgt_f, mask_f)
    return out[0, 0]


def _ref_loss(output, mask, ind, target):
    """Plain-JAX reference mirroring the PyTorch semantics (for verification)."""
    B, C, H, W = output.shape
    feat = jnp.transpose(output, (0, 2, 3, 1)).reshape(B, H * W, C)
    pred = jnp.take_along_axis(feat, ind[..., None].astype(jnp.int32), axis=1)  # (B, K, C)
    m = mask.astype(jnp.float32)[..., None]
    return jnp.mean(jnp.abs(pred * m - target.astype(jnp.float32) * m))


if __name__ == "__main__":
    B, C, H, W, K = 2, 4, 16, 16, 8
    key = jax.random.PRNGKey(0)
    k1, k2, k3, k4 = jax.random.split(key, 4)

    output = jax.random.normal(k1, (B, C, H, W), dtype=jnp.float32)
    mask = jax.random.bernoulli(k2, 0.7, (B, K)).astype(jnp.float32)
    ind = jax.random.randint(k3, (B, K), 0, H * W, dtype=jnp.int32)
    target = jax.random.normal(k4, (B, K, C), dtype=jnp.float32)

    loss = jax.block_until_ready(l1_loss(output, mask, ind, target))
    ref = jax.block_until_ready(_ref_loss(output, mask, ind, target))

    assert jnp.allclose(loss, ref, rtol=1e-5, atol=1e-5), (loss, ref)
    print("KERNEL_OK")
</pallas_src>

<mosaic_0001>
module attributes {stable_mosaic.version = 11 : i64} {
  func.func @_l1_loss_kernel(%arg0: i32, %arg1: memref<2x8xi32, #tpu.memory_space<smem>>, %arg2: memref<1x256x4xf32, #tpu.memory_space<vmem>>, %arg3: memref<1x8x4xf32, #tpu.memory_space<vmem>>, %arg4: memref<1x8x1xf32, #tpu.memory_space<vmem>>, %arg5: memref<1x1xf32, #tpu.memory_space<smem>>, %arg6: memref<8x4xf32, #tpu.memory_space<vmem>>, %arg7: memref<8x4xf32, #tpu.memory_space<vmem>>) attributes {dimension_semantics = [#tpu.dimension_semantics<arbitrary>], iteration_bounds = array<i64: 2>, scalar_prefetch = 1 : i64, scratch_operands = 2 : i64, tpu.core_type = #tpu.core_type<tc>, window_params = [{transform_indices = @transform_0, window_bounds = array<i64: 1, 256, 4>}, {transform_indices = @transform_1, window_bounds = array<i64: 1, 8, 4>}, {transform_indices = @transform_2, window_bounds = array<i64: 1, 8, 1>}, {transform_indices = @transform_3, window_bounds = array<i64: 1, 1>}]} {
    %c0_i32 = arith.constant 0 : i32
    %0 = arith.cmpi eq, %arg0, %c0_i32 : i32
    %1 = arith.extui %0 : i1 to i32
    %c0_i32_0 = arith.constant 0 : i32
    %2 = arith.cmpi ne, %1, %c0_i32_0 : i32
    scf.if %2 {
      %cst = arith.constant 0.000000e+00 : f32
      %66 = vector.broadcast %cst : f32 to vector<8x4xf32>
      %c0_46 = arith.constant 0 : index
      %c0_47 = arith.constant 0 : index
      %67 = vector.load %arg7[%c0_46, %c0_47] : memref<8x4xf32, #tpu.memory_space<vmem>>, vector<8x4xf32>
      tpu.vector_store %arg7[%c0_46, %c0_47], %66 {strides = array<i32>} : memref<8x4xf32, #tpu.memory_space<vmem>>, vector<8x4xf32>,
    } else {
    }
    %3 = arith.index_cast %arg0 : i32 to index
    %c0 = arith.constant 0 : index
    %4 = memref.load %arg1[%3, %c0] : memref<2x8xi32, #tpu.memory_space<smem>>
    %c0_1 = arith.constant 0 : index
    %5 = arith.index_cast %4 : i32 to index
    %c0_2 = arith.constant 0 : index
    %6 = vector.load %arg2[%c0_1, %5, %c0_2] : memref<1x256x4xf32, #tpu.memory_space<vmem>>, vector<1x1x4xf32>
    %7 = vector.shape_cast %6 : vector<1x1x4xf32> to vector<1x4xf32>
    %c0_3 = arith.constant 0 : index
    %c0_4 = arith.constant 0 : index
    %8 = vector.load %arg6[%c0_3, %c0_4] : memref<8x4xf32, #tpu.memory_space<vmem>>, vector<1x4xf32>
    tpu.vector_store %arg6[%c0_3, %c0_4], %7 {strides = array<i32>} : memref<8x4xf32, #tpu.memory_space<vmem>>, vector<1x4xf32>,
    %9 = arith.index_cast %arg0 : i32 to index
    %c1 = arith.constant 1 : index
    %10 = memref.load %arg1[%9, %c1] : memref<2x8xi32, #tpu.memory_space<smem>>
    %c0_5 = arith.constant 0 : index
    %11 = arith.index_cast %10 : i32 to index
    %c0_6 = arith.constant 0 : index
    %12 = vector.load %arg2[%c0_5, %11, %c0_6] : memref<1x256x4xf32, #tpu.memory_space<vmem>>, vector<1x1x4xf32>
    %13 = vector.shape_cast %12 : vector<1x1x4xf32> to vector<1x4xf32>
    %c1_7 = arith.constant 1 : index
    %c0_8 = arith.constant 0 : index
    %14 = vector.load %arg6[%c1_7, %c0_8] : memref<8x4xf32, #tpu.memory_space<vmem>>, vector<1x4xf32>
    tpu.vector_store %arg6[%c1_7, %c0_8], %13 {strides = array<i32>} : memref<8x4xf32, #tpu.memory_space<vmem>>, vector<1x4xf32>,
    %15 = arith.index_cast %arg0 : i32 to index
    %c2 = arith.constant 2 : index
    %16 = memref.load %arg1[%15, %c2] : memref<2x8xi32, #tpu.memory_space<smem>>
    %c0_9 = arith.constant 0 : index
    %17 = arith.index_cast %16 : i32 to index
    %c0_10 = arith.constant 0 : index
    %18 = vector.load %arg2[%c0_9, %17, %c0_10] : memref<1x256x4xf32, #tpu.memory_space<vmem>>, vector<1x1x4xf32>
    %19 = vector.shape_cast %18 : vector<1x1x4xf32> to vector<1x4xf32>
    %c2_11 = arith.constant 2 : index
    %c0_12 = arith.constant 0 : index
    %20 = vector.load %arg6[%c2_11, %c0_12] : memref<8x4xf32, #tpu.memory_space<vmem>>, vector<1x4xf32>
    tpu.vector_store %arg6[%c2_11, %c0_12], %19 {strides = array<i32>} : memref<8x4xf32, #tpu.memory_space<vmem>>, vector<1x4xf32>,
    %21 = arith.index_cast %arg0 : i32 to index
    %c3 = arith.constant 3 : index
    %22 = memref.load %arg1[%21, %c3] : memref<2x8xi32, #tpu.memory_space<smem>>
    %c0_13 = arith.constant 0 : index
    %23 = arith.index_cast %22 : i32 to index
    %c0_14 = arith.constant 0 : index
    %24 = vector.load %arg2[%c0_13, %23, %c0_14] : memref<1x256x4xf32, #tpu.memory_space<vmem>>, vector<1x1x4xf32>
    %25 = vector.shape_cast %24 : vector<1x1x4xf32> to vector<1x4xf32>
    %c3_15 = arith.constant 3 : index
    %c0_16 = arith.constant 0 : index
    %26 = vector.load %arg6[%c3_15, %c0_16] : memref<8x4xf32, #tpu.memory_space<vmem>>, vector<1x4xf32>
    tpu.vector_store %arg6[%c3_15, %c0_16], %25 {strides = array<i32>} : memref<8x4xf32, #tpu.memory_space<vmem>>, vector<1x4xf32>,
    %27 = arith.index_cast %arg0 : i32 to index
    %c4 = arith.constant 4 : index
    %28 = memref.load %arg1[%27, %c4] : memref<2x8xi32, #tpu.memory_space<smem>>
    %c0_17 = arith.constant 0 : index
    %29 = arith.index_cast %28 : i32 to index
    %c0_18 = arith.constant 0 : index
    %30 = vector.load %arg2[%c0_17, %29, %c0_18] : memref<1x256x4xf32, #tpu.memory_space<vmem>>, vector<1x1x4xf32>
    %31 = vector.shape_cast %30 : vector<1x1x4xf32> to vector<1x4xf32>
    %c4_19 = arith.constant 4 : index
    %c0_20 = arith.constant 0 : index
    %32 = vector.load %arg6[%c4_19, %c0_20] : memref<8x4xf32, #tpu.memory_space<vmem>>, vector<1x4xf32>
    tpu.vector_store %arg6[%c4_19, %c0_20], %31 {strides = array<i32>} : memref<8x4xf32, #tpu.memory_space<vmem>>, vector<1x4xf32>,
    %33 = arith.index_cast %arg0 : i32 to index
    %c5 = arith.constant 5 : index
    %34 = memref.load %arg1[%33, %c5] : memref<2x8xi32, #tpu.memory_space<smem>>
    %c0_21 = arith.constant 0 : index
    %35 = arith.index_cast %34 : i32 to index
    %c0_22 = arith.constant 0 : index
    %36 = vector.load %arg2[%c0_21, %35, %c0_22] : memref<1x256x4xf32, #tpu.memory_space<vmem>>, vector<1x1x4xf32>
    %37 = vector.shape_cast %36 : vector<1x1x4xf32> to vector<1x4xf32>
    %c5_23 = arith.constant 5 : index
    %c0_24 = arith.constant 0 : index
    %38 = vector.load %arg6[%c5_23, %c0_24] : memref<8x4xf32, #tpu.memory_space<vmem>>, vector<1x4xf32>
    tpu.vector_store %arg6[%c5_23, %c0_24], %37 {strides = array<i32>} : memref<8x4xf32, #tpu.memory_space<vmem>>, vector<1x4xf32>,
    %39 = arith.index_cast %arg0 : i32 to index
    %c6 = arith.constant 6 : index
    %40 = memref.load %arg1[%39, %c6] : memref<2x8xi32, #tpu.memory_space<smem>>
    %c0_25 = arith.constant 0 : index
    %41 = arith.index_cast %40 : i32 to index
    %c0_26 = arith.constant 0 : index
    %42 = vector.load %arg2[%c0_25, %41, %c0_26] : memref<1x256x4xf32, #tpu.memory_space<vmem>>, vector<1x1x4xf32>
    %43 = vector.shape_cast %42 : vector<1x1x4xf32> to vector<1x4xf32>
    %c6_27 = arith.constant 6 : index
    %c0_28 = arith.constant 0 : index
    %44 = vector.load %arg6[%c6_27, %c0_28] : memref<8x4xf32, #tpu.memory_space<vmem>>, vector<1x4xf32>
    tpu.vector_store %arg6[%c6_27, %c0_28], %43 {strides = array<i32>} : memref<8x4xf32, #tpu.memory_space<vmem>>, vector<1x4xf32>,
    %45 = arith.index_cast %arg0 : i32 to index
    %c7 = arith.constant 7 : index
    %46 = memref.load %arg1[%45, %c7] : memref<2x8xi32, #tpu.memory_space<smem>>
    %c0_29 = arith.constant 0 : index
    %47 = arith.index_cast %46 : i32 to index
    %c0_30 = arith.constant 0 : index
    %48 = vector.load %arg2[%c0_29, %47, %c0_30] : memref<1x256x4xf32, #tpu.memory_space<vmem>>, vector<1x1x4xf32>
    %49 = vector.shape_cast %48 : vector<1x1x4xf32> to vector<1x4xf32>
    %c7_31 = arith.constant 7 : index
    %c0_32 = arith.constant 0 : index
    %50 = vector.load %arg6[%c7_31, %c0_32] : memref<8x4xf32, #tpu.memory_space<vmem>>, vector<1x4xf32>
    tpu.vector_store %arg6[%c7_31, %c0_32], %49 {strides = array<i32>} : memref<8x4xf32, #tpu.memory_space<vmem>>, vector<1x4xf32>,
    %c0_33 = arith.constant 0 : index
    %c0_34 = arith.constant 0 : index
    %51 = vector.load %arg6[%c0_33, %c0_34] : memref<8x4xf32, #tpu.memory_space<vmem>>, vector<8x4xf32>
    %c0_35 = arith.constant 0 : index
    %c0_36 = arith.constant 0 : index
    %c0_37 = arith.constant 0 : index
    %52 = vector.load %arg3[%c0_35, %c0_36, %c0_37] : memref<1x8x4xf32, #tpu.memory_space<vmem>>, vector<1x8x4xf32>
    %53 = vector.shape_cast %52 : vector<1x8x4xf32> to vector<8x4xf32>
    %c0_38 = arith.constant 0 : index
    %c0_39 = arith.constant 0 : index
    %c0_40 = arith.constant 0 : index
    %54 = vector.load %arg4[%c0_38, %c0_39, %c0_40] : memref<1x8x1xf32, #tpu.memory_space<vmem>>, vector<1x8x1xf32>
    %55 = vector.shape_cast %54 : vector<1x8x1xf32> to vector<8x1xf32>
    %c0_41 = arith.constant 0 : index
    %c0_42 = arith.constant 0 : index
    %56 = vector.load %arg7[%c0_41, %c0_42] : memref<8x4xf32, #tpu.memory_space<vmem>>, vector<8x4xf32>
    %57 = arith.subf %51, %53 : vector<8x4xf32>
    %58 = vector.broadcast %55 : vector<8x1xf32> to vector<8x4xf32>
    %59 = arith.mulf %57, %58 : vector<8x4xf32>
    %60 = math.absf %59 : vector<8x4xf32>
    %61 = arith.addf %56, %60 : vector<8x4xf32>
    %c0_43 = arith.constant 0 : index
    %c0_44 = arith.constant 0 : index
    %62 = vector.load %arg7[%c0_43, %c0_44] : memref<8x4xf32, #tpu.memory_space<vmem>>, vector<8x4xf32>
    tpu.vector_store %arg7[%c0_43, %c0_44], %61 {strides = array<i32>} : memref<8x4xf32, #tpu.memory_space<vmem>>, vector<8x4xf32>,
    %c1_i32 = arith.constant 1 : i32
    %63 = arith.cmpi eq, %arg0, %c1_i32 : i32
    %64 = arith.extui %63 : i1 to i32
    %c0_i32_45 = arith.constant 0 : i32
    %65 = arith.cmpi ne, %64, %c0_i32_45 : i32
    scf.if %65 {
      %c0_46 = arith.constant 0 : index
      %c0_47 = arith.constant 0 : index
      %66 = vector.load %arg7[%c0_46, %c0_47] : memref<8x4xf32, #tpu.memory_space<vmem>>, vector<8x4xf32>
      %67 = vector.shape_cast %66 : vector<8x4xf32> to vector<1x8x4xf32>
      %cst = arith.constant dense<0.000000e+00> : vector<1xf32>
      %68 = vector.multi_reduction <add>, %67, %cst [1, 2] : vector<1x8x4xf32> to vector<1xf32>
      %69 = vector.shape_cast %68 : vector<1xf32> to vector<1x1x1xf32>
      %70 = vector.extract %69[0, 0, 0] : f32 from vector<1x1x1xf32>
      %cst_48 = arith.constant 1.562500e-02 : f32
      %71 = arith.mulf %70, %cst_48 : f32
      %c0_49 = arith.constant 0 : index
      %c0_50 = arith.constant 0 : index
      %72 = memref.load %arg5[%c0_49, %c0_50] : memref<1x1xf32, #tpu.memory_space<smem>>
      memref.store %71, %arg5[%c0_49, %c0_50] : memref<1x1xf32, #tpu.memory_space<smem>>
    } else {
    }
    return
  }
  func.func @transform_0(%arg0: i32, %arg1: memref<2x8xi32, #tpu.memory_space<smem>>) -> (i32, i32, i32) {
    %c0_i32 = arith.constant 0 : i32
    %c0_i32_0 = arith.constant 0 : i32
    %c0_i32_1 = arith.constant 0 : i32
    return %arg0, %c0_i32, %c0_i32_0 : i32, i32, i32
  }
  func.func @transform_1(%arg0: i32, %arg1: memref<2x8xi32, #tpu.memory_space<smem>>) -> (i32, i32, i32) {
    %c0_i32 = arith.constant 0 : i32
    %c0_i32_0 = arith.constant 0 : i32
    %c0_i32_1 = arith.constant 0 : i32
    return %arg0, %c0_i32, %c0_i32_0 : i32, i32, i32
  }
  func.func @transform_2(%arg0: i32, %arg1: memref<2x8xi32, #tpu.memory_space<smem>>) -> (i32, i32, i32) {
    %c0_i32 = arith.constant 0 : i32
    %c0_i32_0 = arith.constant 0 : i32
    %c0_i32_1 = arith.constant 0 : i32
    return %arg0, %c0_i32, %c0_i32_0 : i32, i32, i32
  }
  func.func @transform_3(%arg0: i32, %arg1: memref<2x8xi32, #tpu.memory_space<smem>>) -> (i32, i32) {
    %c0_i32 = arith.constant 0 : i32
    %c0_i32_0 = arith.constant 0 : i32
    %c0_i32_1 = arith.constant 0 : i32
    return %c0_i32, %c0_i32_0 : i32, i32
  }
}

</mosaic_0001>

<llo_original>
// kernel: tpu_custom_call.1
$region0: #{tpu_custom_call.1}
  #allocation0 [shape = 'u32[]', space=smem, size = 0x4, offset = 0x4, fixed_abs, tag = 'smem constant byte address 0x4 - core index']
  #allocation1 [shape = 'u32[72,128]{1,0:T(1,128)}', space=vmem, size = 0x9000, scoped, tag = 'internal scratch']
  #allocation2 [shape = 'f32[8,4]{1,0:T(8,128)}', space=vmem, size = 0x1000, scoped, tag = 'scratch operand']
  #allocation3 [shape = 'f32[8,4]{1,0:T(8,128)}', space=vmem, size = 0x1000, scoped, tag = 'scratch operand']
  #allocation4 [shape = 's32[1]{0}', space=sflag, size = 0x4, scoped, tag = 'scoped memory for tpu_custom_call.1']
  #allocation5 [shape = 'u8[1024]{0}', space=smem, size = 0x400, scoped, tag = 'prefetched SMEM operand 0']
  %s0 = inlined_call_operand.vmem [shape: s32[2,8], index: 0, kind: input, shape index: {}]
  %s1 = inlined_call_operand.vmem [shape: f32[2,256,4], index: 1, kind: input, shape index: {}]
  %s2 = inlined_call_operand.vmem [shape: f32[2,8,4], index: 2, kind: input, shape index: {}]
  %s3 = inlined_call_operand.vmem [shape: f32[2,8,1], index: 3, kind: input, shape index: {}]
  %s4 = inlined_call_operand.hbm [shape: f32[1,1], index: 4, kind: output, shape index: {}]
  %s5 = sld [smem:[#allocation0]]
  $region53: #{tpu_custom_call.1} parent=0
    _
  %s7 = ssub.s32 1, %s5
  %s8 = scalar_select 0, %s7, %s5
  %s10 = sshll.u32 %s0, 4
  %s11 = int_to_ptr.vmem [resolvable:$true] %s10
  %13 = dma.vmem_to_smem %s11, 32, [#allocation5], [#allocation4]
  %15 = dma.done [#allocation4], 32
  %16 = sfence
  $region1: #{tpu_custom_call.1} parent=0
    #allocation6 [shape = 'u8[512]{0}', space=smem, size = 0x200, scoped, tag = 'output window, operand 0, single buffered']
    #allocation7 [shape = 's32[2]{0}', space=sflag, size = 0x8, scoped, tag = 'scoped memory for tpu_custom_call.1']
    %17 = vsyncpa [#allocation7], 0
    loop: start=0, step=1, limit=4
    $region2: #{tpu_custom_call.1} parent=1 // loop_pre_header
      _
    $region3: #{tpu_custom_call.1} parent=1 // loop_header
      %s19 = sphi 0, %s23
      %p20 = scmp.ge.s32.totalorder %s19, 4
      %s29 = sphi 0, %s31
      %s32 = sphi 0, %s29
      %s33 = sphi 0, %s32
      %s49 = sphi 0, %s33
      %s55 = sphi 0, %s57
      %s58 = sphi 0, %s55
      %s59 = sphi 0, %s58
      %s75 = sphi 0, %s59
      %s81 = sphi 0, %s83
      %s84 = sphi 0, %s81
      %s85 = sphi 0, %s84
      %s101 = sphi 0, %s85
      %s105 = sphi 0, %s105
      %s107 = sphi 0, %s105
      %s108 = sphi 0, %s107
      %s122 = sphi 0, %s108
    $region4: #{tpu_custom_call.1} parent=1 // loop_header_branch
      %22 = sbr.rel (%p20) target = $region8
    $region5: #{tpu_custom_call.1} parent=1 // loop_body
      %s24 = ssub.s32 %s19, 1
      %s25 = ssub.s32 %s19, 2
      %s26 = sadd.s32 %s19, 1
      %s27 = ssub.s32 %s19, %s26
      %p28 = scmp.eq.s32.totalorder %s27, 0
      %s30 = sadd.s32 %s29, 1
      %s31 = scalar_select %p28, %s29, %s30
      %p34 = pneg %p28
      %p35 = scmp.eq.s32.totalorder %s19, 1
      %p36 = por %p34, %p35
      %p37 = scmp.ne.s32.totalorder %s29, %s32
      %p38 = scmp.eq.s32.totalorder %s19, 0
      %p39 = por %p37, %p38
      %p40 = scmp.ne.s32.totalorder %s29, %s32
      %p41 = scmp.eq.s32.totalorder %s24, 1
      %p42 = por %p40, %p41
      %p43 = scmp.ne.s32.totalorder %s32, %s33
      %p44 = scmp.eq.s32.totalorder %s24, 0
      %p45 = por %p43, %p44
      %p46 = scmp.ne.s32.totalorder %s32, %s33
      %p47 = scmp.eq.s32.totalorder %s25, 1
      %p48 = por %p46, %p47
      %p50 = scmp.ne.s32.totalorder %s33, %s49
      %p51 = scmp.eq.s32.totalorder %s25, 0
      %p52 = por %p50, %p51
      %s53 = ssub.s32 %s19, %s26
      %p54 = scmp.eq.s32.totalorder %s53, 0
      %s56 = sadd.s32 %s55, 1
      %s57 = scalar_select %p54, %s55, %s56
      %p60 = pneg %p54
      %p61 = scmp.eq.s32.totalorder %s19, 1
      %p62 = por %p60, %p61
      %p63 = scmp.ne.s32.totalorder %s55, %s58
      %p64 = scmp.eq.s32.totalorder %s19, 0
      %p65 = por %p63, %p64
      %p66 = scmp.ne.s32.totalorder %s55, %s58
      %p67 = scmp.eq.s32.totalorder %s24, 1
      %p68 = por %p66, %p67
      %p69 = scmp.ne.s32.totalorder %s58, %s59
      %p70 = scmp.eq.s32.totalorder %s24, 0
      %p71 = por %p69, %p70
      %p72 = scmp.ne.s32.totalorder %s58, %s59
      %p73 = scmp.eq.s32.totalorder %s25, 1
      %p74 = por %p72, %p73
      %p76 = scmp.ne.s32.totalorder %s59, %s75
      %p77 = scmp.eq.s32.totalorder %s25, 0
      %p78 = por %p76, %p77
      %s79 = ssub.s32 %s19, %s26
      %p80 = scmp.eq.s32.totalorder %s79, 0
      %s82 = sadd.s32 %s81, 1
      %s83 = scalar_select %p80, %s81, %s82
      %p86 = pneg %p80
      %p87 = scmp.eq.s32.totalorder %s19, 1
      %p88 = por %p86, %p87
      %p89 = scmp.ne.s32.totalorder %s81, %s84
      %p90 = scmp.eq.s32.totalorder %s19, 0
      %p91 = por %p89, %p90
      %p92 = scmp.ne.s32.totalorder %s81, %s84
      %p93 = scmp.eq.s32.totalorder %s24, 1
      %p94 = por %p92, %p93
      %p95 = scmp.ne.s32.totalorder %s84, %s85
      %p96 = scmp.eq.s32.totalorder %s24, 0
      %p97 = por %p95, %p96
      %p98 = scmp.ne.s32.totalorder %s84, %s85
      %p99 = scmp.eq.s32.totalorder %s25, 1
      %p100 = por %p98, %p99
      %p102 = scmp.ne.s32.totalorder %s85, %s101
      %p103 = scmp.eq.s32.totalorder %s25, 0
      %p104 = por %p102, %p103
      %s106 = sadd.s32 %s105, 1
      %p109 = scmp.eq.s32.totalorder %s19, 1
      %p110 = scmp.ne.s32.totalorder %s105, %s107
      %p111 = scmp.eq.s32.totalorder %s19, 0
      %p112 = por %p110, %p111
      %p113 = scmp.ne.s32.totalorder %s105, %s107
      %p114 = scmp.eq.s32.totalorder %s24, 1
      %p115 = por %p113, %p114
      %p116 = scmp.ne.s32.totalorder %s107, %s108
      %p117 = scmp.eq.s32.totalorder %s24, 0
      %p118 = por %p116, %p117
      %p119 = scmp.ne.s32.totalorder %s107, %s108
      %p120 = scmp.eq.s32.totalorder %s25, 1
      %p121 = por %p119, %p120
      %p123 = scmp.ne.s32.totalorder %s108, %s122
      %p124 = scmp.eq.s32.totalorder %s25, 0
      %p125 = por %p123, %p124
      %p126 = scmp.le.s32.totalorder 1, %s19
      %p127 = scmp.lt.s32.totalorder %s19, 3
      %p128 = pnand %p126, %p127
      %p129 = pneg %p128
      // Predicated region
      $region9: #{tpu_custom_call.1} parent=5 // pred_check
        _
      $region10: #{tpu_custom_call.1} parent=5 // pred_check_branch
        %131 = sbr.rel (%p128) target = $region12
      $region11: #{tpu_custom_call.1} parent=5 // pred_region
        %s132 = ssub.s32 %s19, 1
      $region12: #{tpu_custom_call.1} parent=5 // pred_fallthru
        _
      %p133 = scmp.lt.s32.totalorder %s19, 2
      // Predicated region
      $region13: #{tpu_custom_call.1} parent=5 // pred_check
        %p134 = pneg %p133
      $region14: #{tpu_custom_call.1} parent=5 // pred_check_branch
        %136 = sbr.rel (%p134) target = $region16
      $region15: #{tpu_custom_call.1} parent=5 // pred_region
        // Predicated region
        $region17: #{tpu_custom_call.1} parent=15 // pred_check
          %p137 = pneg %p39
        $region18: #{tpu_custom_call.1} parent=15 // pred_check_branch
          %139 = sbr.rel (%p137) target = $region20
        $region19: #{tpu_custom_call.1} parent=15 // pred_region
          %p140 = scmp.lt.s32.totalorder %s19, 1
          %s141 = scalar_select %p140, %s19, 1
          %s142 = smul.addr %s141, 32
          %s143 = smul.addr %s142, 8
          %s144 = scalar_lea.vmem %s1, %s143
        $region20: #{tpu_custom_call.1} parent=15 // pred_fallthru
          _
        // Predicated region
        $region21: #{tpu_custom_call.1} parent=15 // pred_check
          %p145 = pneg %p65
        $region22: #{tpu_custom_call.1} parent=15 // pred_check_branch
          %147 = sbr.rel (%p145) target = $region24
        $region23: #{tpu_custom_call.1} parent=15 // pred_region
          %p148 = scmp.lt.s32.totalorder %s19, 1
          %s149 = scalar_select %p148, %s19, 1
          %s150 = smul.addr %s149, 8
          %s151 = scalar_lea.vmem %s2, %s150
        $region24: #{tpu_custom_call.1} parent=15 // pred_fallthru
          _
        // Predicated region
        $region25: #{tpu_custom_call.1} parent=15 // pred_check
          %p152 = pneg %p91
        $region26: #{tpu_custom_call.1} parent=15 // pred_check_branch
          %154 = sbr.rel (%p152) target = $region28
        $region27: #{tpu_custom_call.1} parent=15 // pred_region
          %p155 = scmp.lt.s32.totalorder %s19, 1
          %s156 = scalar_select %p155, %s19, 1
          %s157 = smul.addr %s156, 8
          %s158 = scalar_lea.vmem %s3, %s157
        $region28: #{tpu_custom_call.1} parent=15 // pred_fallthru
          _
      $region16: #{tpu_custom_call.1} parent=5 // pred_fallthru
        _
      %p159 = scmp.le.s32.totalorder 1, %s19
      %p160 = scmp.lt.s32.totalorder %s19, 3
      %p161 = pnand %p159, %p160
      %p162 = pneg %p161
      // Predicated region
      $region29: #{tpu_custom_call.1} parent=5 // pred_check
        _
      $region30: #{tpu_custom_call.1} parent=5 // pred_check_branch
        %164 = sbr.rel (%p161) target = $region32
      $region31: #{tpu_custom_call.1} parent=5 // pred_region
        %s165 = ssub.s32 %s19, 1
        %p166 = scmp.lt.s32.totalorder %s24, 1
        %s167 = scalar_select %p166, %s24, 1
        %s168 = smul.addr %s167, 32
        %s169 = smul.addr %s168, 8
        %s170 = scalar_lea.vmem %s1, %s169
        %p171 = pneg %p45
        %p172 = pneg %p42
        %p173 = scmp.lt.s32.totalorder %s24, 1
        %s174 = scalar_select %p173, %s24, 1
        %s175 = smul.addr %s174, 8
        %s176 = scalar_lea.vmem %s2, %s175
        %p177 = pneg %p71
        %p178 = pneg %p68
        %p179 = scmp.lt.s32.totalorder %s24, 1
        %s180 = scalar_select %p179, %s24, 1
        %s181 = smul.addr %s180, 8
        %s182 = scalar_lea.vmem %s3, %s181
        %p183 = pneg %p97
        %p184 = pneg %p94
        %p185 = pneg %p118
        %p186 = pneg %p115
        %p187 = scmp.lt.s32.totalorder %s24, 1
        %s188 = scalar_select %p187, %s24, 1
        %s189 = smul.addr %s188, 32
        %s190 = smul.addr %s189, 8
        %s191 = scalar_lea.vmem %s1, %s190
        %p192 = scmp.lt.s32.totalorder %s24, 1
        %s193 = scalar_select %p192, %s24, 1
        %s194 = smul.addr %s193, 8
        %s195 = scalar_lea.vmem %s2, %s194
        %p196 = scmp.lt.s32.totalorder %s24, 1
        %s197 = scalar_select %p196, %s24, 1
        %s198 = smul.addr %s197, 8
        %s199 = scalar_lea.vmem %s3, %s198
        %p200 = scmp.eq.s32.totalorder %s24, 0
        // Predicated region
        $region33: #{tpu_custom_call.1} parent=31 // pred_check
          %p201 = pneg %p200
        $region34: #{tpu_custom_call.1} parent=31 // pred_check_branch
          %203 = sbr.rel (%p201) target = $region36
        $region35: #{tpu_custom_call.1} parent=31 // pred_region
          %vm204 = vcmask 31744
          %205 = vst.msk [vmem:[#allocation3] sm:$0xff] %vm204, 0.0
        $region36: #{tpu_custom_call.1} parent=31 // pred_fallthru
          _
        %s206 = smul.u32 %s24, 128
        %s207 = sld [smem:[#allocation5 + %s206]]
        %s208 = scalar_lea.vmem %s191, %s207
        %v209 = vld [vmem:[%s208] sm:$0x1]
        %vm210 = vcmask 24576
        %211 = vst.msk [vmem:[#allocation2] sm:$0x1] %vm210, %v209
        %s212 = sadd.s32 %s206, 1
        %s213 = sld [smem:[#allocation5 + %s212]]
        %s214 = scalar_lea.vmem %s191, %s213
        %v215 = vld [vmem:[%s214] sm:$0x1]
        %216 = vst.msk [vmem:[#allocation2 + $0x1] sm:$0x1] %vm210, %v215
        %s217 = sadd.s32 %s206, 2
        %s218 = sld [smem:[#allocation5 + %s217]]
        %s219 = scalar_lea.vmem %s191, %s218
        %v220 = vld [vmem:[%s219] sm:$0x1]
        %221 = vst.msk [vmem:[#allocation2 + $0x2] sm:$0x1] %vm210, %v220
        %s222 = sadd.s32 %s206, 3
        %s223 = sld [smem:[#allocation5 + %s222]]
        %s224 = scalar_lea.vmem %s191, %s223
        %v225 = vld [vmem:[%s224] sm:$0x1]
        %226 = vst.msk [vmem:[#allocation2 + $0x3] sm:$0x1] %vm210, %v225
        %s227 = sadd.s32 %s206, 4
        %s228 = sld [smem:[#allocation5 + %s227]]
        %s229 = scalar_lea.vmem %s191, %s228
        %v230 = vld [vmem:[%s229] sm:$0x1]
        %231 = vst.msk [vmem:[#allocation2 + $0x4] sm:$0x1] %vm210, %v230
        %s232 = sadd.s32 %s206, 5
        %s233 = sld [smem:[#allocation5 + %s232]]
        %s234 = scalar_lea.vmem %s191, %s233
        %v235 = vld [vmem:[%s234] sm:$0x1]
        %236 = vst.msk [vmem:[#allocation2 + $0x5] sm:$0x1] %vm210, %v235
        %s237 = sadd.s32 %s206, 6
        %s238 = sld [smem:[#allocation5 + %s237]]
        %s239 = scalar_lea.vmem %s191, %s238
        %v240 = vld [vmem:[%s239] sm:$0x1]
        %241 = vst.msk [vmem:[#allocation2 + $0x6] sm:$0x1] %vm210, %v240
        %s242 = sadd.s32 %s206, 7
        %s243 = sld [smem:[#allocation5 + %s242]]
        %s244 = scalar_lea.vmem %s191, %s243
        %v245 = vld [vmem:[%s244] sm:$0x1]
        %246 = vst.msk [vmem:[#allocation2 + $0x7] sm:$0x1] %vm210, %v245
        %v247 = vld [vmem:[#allocation2] sm:$0xff]
        %v248 = vld [vmem:[%s195] sm:$0xff]
        %v249 = vld [vmem:[%s199] sm:$0xff]
        %v250 = vld [vmem:[#allocation3] sm:$0xff]
        %v251 = vsub.f32 %v247, %v248
        %253 = vset.pattern.permute.xlu0 0
        %254 = vperm.xlu0 %253, %v249
        %v255 = vpop.permute.xlu0 %254
        %v257 = vmul.f32 %v251, %v255
        %v258 = vand.u32 2147483647, %v257
        %v259 = vadd.f32 %v250, %v258
        %vm260 = vcmask 31744
        %261 = vst.msk [vmem:[#allocation3] sm:$0xff] %vm260, %v259
        %p262 = scmp.eq.s32.totalorder %s24, 1
        // Predicated region
        $region37: #{tpu_custom_call.1} parent=31 // pred_check
          %p263 = pneg %p262
        $region38: #{tpu_custom_call.1} parent=31 // pred_check_branch
          %265 = sbr.rel (%p263) target = $region40
        $region39: #{tpu_custom_call.1} parent=31 // pred_region
          %v266 = vld [vmem:[#allocation3] sm:$0xff]
          %v267 = vsel %vm260, %v266, 0.0
          %268 = vadd.xlane.f32.xlu0 %v267
          %v269 = vpop.xlane.xlu0 %268
          %v270 = vrot.slane %v269, 4
          %v271 = vadd.f32 %v269, %v270
          %v272 = vrot.slane %v271, 2
          %v273 = vadd.f32 %v271, %v272
          %v274 = vrot.slane %v273, 1
          %v275 = vadd.f32 %v273, %v274
          %s276 = vtos %v275
          %s277 = smul.f32 %s276, 0.015625
          %s278 = scalar_lea.smem [#allocation6], 0
          %279 = sst [smem:[%s278]] %s277
        $region40: #{tpu_custom_call.1} parent=31 // pred_fallthru
          _
        // Predicated region
        $region41: #{tpu_custom_call.1} parent=31 // pred_check
          %p280 = pneg %p115
        $region42: #{tpu_custom_call.1} parent=31 // pred_check_branch
          %282 = sbr.rel (%p280) target = $region44
        $region43: #{tpu_custom_call.1} parent=31 // pred_region
          %284 = vsyncadd [#allocation7], 0
          %s286 = sshll.u32 %s4, 4
          %s287 = int_to_ptr.hbm [resolvable:$true] %s286
          %289 = dma.smem_to_hbm [#allocation6], 16, %s287, [#allocation7]
        $region44: #{tpu_custom_call.1} parent=31 // pred_fallthru
          _
        // Predicated region
        $region45: #{tpu_custom_call.1} parent=31 // pred_check
          %p290 = pneg %p115
        $region46: #{tpu_custom_call.1} parent=31 // pred_check_branch
          %292 = sbr.rel (%p290) target = $region48
        $region47: #{tpu_custom_call.1} parent=31 // pred_region
          %294 = dma.done [#allocation7], 16
        $region48: #{tpu_custom_call.1} parent=31 // pred_fallthru
          _
        %295 = sfence
      $region32: #{tpu_custom_call.1} parent=5 // pred_fallthru
        _
      %p296 = scmp.le.s32.totalorder 2, %s19
      // Predicated region
      $region49: #{tpu_custom_call.1} parent=5 // pred_check
        %p297 = pneg %p296
      $region50: #{tpu_custom_call.1} parent=5 // pred_check_branch
        %299 = sbr.rel (%p297) target = $region52
      $region51: #{tpu_custom_call.1} parent=5 // pred_region
        %s300 = ssub.s32 %s19, 2
      $region52: #{tpu_custom_call.1} parent=5 // pred_fallthru
        _
    $region6: #{tpu_custom_call.1} parent=1 // loop_footer
      %s23 = sadd.s32 1, %s19
    $region7: #{tpu_custom_call.1} parent=1 // loop_footer_branch
      %18 = sbr.rel target = $region3
    $region8: #{tpu_custom_call.1} parent=1 // loop_exit
      _
    %301 = vsyncpa [#allocation7], 1
    %s302 = scalar_lea.sflag [#allocation7], 1
    %303 = vsyncpa %s302, 1

</llo_original>
